<compile_context>
chip_gen: v7x
topology: tpu7x:2x2x1
jax: 0.10.0
libtpu: 0.0.40
codegen_flags: <defaults>
</compile_context>

<pallas_src>
import jax
import jax.numpy as jnp
from jax.experimental import pallas as pl
from jax.experimental.pallas import tpu as pltpu

_LANE = 128
_NEG_SLOPE = 0.01  # PyTorch nn.LeakyReLU default negative_slope
_VMEM_BUDGET_BYTES = 8 * 1024 * 1024  # conservative: fits v5e/v6e/v7x scoped defaults


def _embed_noise_kernel(z_ref, w_ref, b_ref, o_ref):
    # Linear on one N-tile: (B, z_dim) @ (z_dim, TN) with f32 accumulation.
    out = jnp.dot(z_ref[...], w_ref[...], preferred_element_type=jnp.float32)
    out = out + b_ref[...].astype(jnp.float32)  # (B, TN) + (1, TN) broadcast
    # LeakyReLU
    out = jnp.where(out > 0, out, _NEG_SLOPE * out)
    o_ref[...] = out.astype(o_ref.dtype)


def _round_up(x, m):
    return ((x + m - 1) // m) * m


def _pick_tile_n(z_dim, batch, out_features, bytes_per_elem):
    """Largest lane-dense N tile whose double-buffered working set fits budget."""
    f_pad = _round_up(out_features, _LANE)
    # 2 pipeline buffers x (weight col + bias col + out col) per output column.
    per_col_bytes = 2 * (z_dim + batch + 1) * bytes_per_elem
    tn = _VMEM_BUDGET_BYTES // max(per_col_bytes, 1)
    tn = max(_LANE, (tn // _LANE) * _LANE)  # multiple of 128, at least 128
    tn = min(tn, 4096, f_pad)               # don't exceed padded N or 4K cap
    return tn


def embed_noise_forward(z, weight, bias, channels):
    """z: (B, z_dim), weight: (z_dim, channels*64), bias: (channels*64,)."""
    B, z_dim = z.shape
    out_features = channels * 4 * 4 * 4
    assert weight.shape == (z_dim, out_features)
    assert bias.shape == (out_features,)

    tn = _pick_tile_n(z_dim, B, out_features, jnp.dtype(jnp.float32).itemsize)
    f_total = _round_up(out_features, tn)
    grid_n = f_total // tn

    # Pad N so every block is full and lane-dense (zeros -> LeakyReLU(0)=0, sliced off).
    pad_n = f_total - out_features
    w_p = jnp.pad(weight, ((0, 0), (0, pad_n))) if pad_n else weight
    b_p = jnp.pad(bias, (0, pad_n)) if pad_n else bias
    b2d = b_p.reshape(1, f_total)

    itemsize = jnp.dtype(z.dtype).itemsize
    w_itemsize = jnp.dtype(w_p.dtype).itemsize
    cost = pl.CostEstimate(
        flops=2 * B * z_dim * f_total,
        transcendentals=0,
        bytes_accessed=(B * z_dim * itemsize
                        + z_dim * f_total * w_itemsize
                        + f_total * w_itemsize
                        + B * f_total * itemsize),
    )

    out = pl.pallas_call(
        _embed_noise_kernel,
        out_shape=jax.ShapeDtypeStruct((B, f_total), z.dtype),
        grid_spec=pl.GridSpec(
            grid=(grid_n,),
            in_specs=[
                pl.BlockSpec((B, z_dim), lambda j: (0, 0)),      # z: resident
                pl.BlockSpec((z_dim, tn), lambda j: (0, j)),     # weight N-tile
                pl.BlockSpec((1, tn), lambda j: (0, j)),         # bias N-tile
            ],
            out_specs=pl.BlockSpec((B, tn), lambda j: (0, j)),   # output N-tile
        ),
        compiler_params=pltpu.CompilerParams(
            dimension_semantics=("parallel",),
        ),
        cost_estimate=cost,
    )(z, w_p, b2d)

    if pad_n:
        out = out[:, :out_features]
    # view((-1, channels, 4, 4, 4))
    return out.reshape(B, channels, 4, 4, 4)


if __name__ == "__main__":
    # Small shapes consistent with the module: z_dim=32, channels=4, batch=2.
    B, z_dim, channels = 2, 32, 4
    out_features = channels * 4 * 4 * 4  # 256

    key = jax.random.PRNGKey(0)
    k_z, k_w, k_b = jax.random.split(key, 3)

    # Deterministic init (mimic nn.Linear uniform(-1/sqrt(in), 1/sqrt(in))).
    bound = 1.0 / (z_dim ** 0.5)
    weight = jax.random.uniform(
        k_w, (z_dim, out_features), dtype=jnp.float32, minval=-bound, maxval=bound
    )
    bias = jax.random.uniform(
        k_b, (out_features,), dtype=jnp.float32, minval=-bound, maxval=bound
    )
    z = jax.random.normal(k_z, (B, z_dim), dtype=jnp.float32)

    out = embed_noise_forward(z, weight, bias, channels)
    out = jax.block_until_ready(out)

    # Reference check in plain JAX.
    ref = z @ weight + bias
    ref = jnp.where(ref > 0, ref, _NEG_SLOPE * ref).reshape(B, channels, 4, 4, 4)
    assert out.shape == (B, channels, 4, 4, 4)
    assert jnp.allclose(out, ref, atol=1e-5, rtol=1e-5)

    print("KERNEL_OK")
</pallas_src>

<mosaic_0001>
module attributes {stable_mosaic.version = 11 : i64} {
  func.func @_embed_noise_kernel(%arg0: i32, %arg1: memref<2x32xf32, #tpu.memory_space<vmem>>, %arg2: memref<32x256xf32, #tpu.memory_space<vmem>>, %arg3: memref<1x256xf32, #tpu.memory_space<vmem>>, %arg4: memref<2x256xf32, #tpu.memory_space<vmem>>) attributes {dimension_semantics = [#tpu.dimension_semantics<parallel>], iteration_bounds = array<i64: 1>, scalar_prefetch = 0 : i64, scratch_operands = 0 : i64, tpu.core_type = #tpu.core_type<tc>, window_params = [{pipeline_mode = #tpu.pipeline_mode<synchronous>, transform_indices = @transform_0, window_bounds = array<i64: 2, 32>}, {transform_indices = @transform_1, window_bounds = array<i64: 32, 256>}, {transform_indices = @transform_2, window_bounds = array<i64: 1, 256>}, {transform_indices = @transform_3, window_bounds = array<i64: 2, 256>}]} {
    %c0 = arith.constant 0 : index
    %c0_0 = arith.constant 0 : index
    %0 = vector.load %arg1[%c0, %c0_0] : memref<2x32xf32, #tpu.memory_space<vmem>>, vector<2x32xf32>
    %c0_1 = arith.constant 0 : index
    %c0_2 = arith.constant 0 : index
    %1 = vector.load %arg2[%c0_1, %c0_2] : memref<32x256xf32, #tpu.memory_space<vmem>>, vector<32x256xf32>
    %cst = arith.constant dense<0.000000e+00> : vector<2x256xf32>
    %2 = tpu.matmul %0, %1, %cst {dimension_numbers = #tpu.dot_dimension_numbers<[1], [0], [0], [1], [0, 0, 1, 1], [], []>} : vector<2x32xf32>, vector<32x256xf32>, vector<2x256xf32> -> vector<2x256xf32>
    %c0_3 = arith.constant 0 : index
    %c0_4 = arith.constant 0 : index
    %3 = vector.load %arg3[%c0_3, %c0_4] : memref<1x256xf32, #tpu.memory_space<vmem>>, vector<1x256xf32>
    %4 = vector.broadcast %3 : vector<1x256xf32> to vector<2x256xf32>
    %5 = arith.addf %2, %4 : vector<2x256xf32>
    %cst_5 = arith.constant 0.000000e+00 : f32
    %6 = vector.broadcast %cst_5 : f32 to vector<2x256xf32>
    %7 = arith.cmpf ogt, %5, %6 : vector<2x256xf32>
    %cst_6 = arith.constant 0.00999999977 : f32
    %8 = vector.broadcast %cst_6 : f32 to vector<2x256xf32>
    %9 = arith.mulf %8, %5 : vector<2x256xf32>
    %10 = arith.select %7, %5, %9 : vector<2x256xi1>, vector<2x256xf32>
    %c0_7 = arith.constant 0 : index
    %c0_8 = arith.constant 0 : index
    %11 = vector.load %arg4[%c0_7, %c0_8] : memref<2x256xf32, #tpu.memory_space<vmem>>, vector<2x256xf32>
    tpu.vector_store %arg4[%c0_7, %c0_8], %10 {strides = array<i32>} : memref<2x256xf32, #tpu.memory_space<vmem>>, vector<2x256xf32>,
    return
  }
  func.func @transform_0(%arg0: i32) -> (i32, i32) {
    %c0_i32 = arith.constant 0 : i32
    %c0_i32_0 = arith.constant 0 : i32
    %c0_i32_1 = arith.constant 0 : i32
    return %c0_i32, %c0_i32_0 : i32, i32
  }
  func.func @transform_1(%arg0: i32) -> (i32, i32) {
    %c0_i32 = arith.constant 0 : i32
    %c0_i32_0 = arith.constant 0 : i32
    return %c0_i32, %arg0 : i32, i32
  }
  func.func @transform_2(%arg0: i32) -> (i32, i32) {
    %c0_i32 = arith.constant 0 : i32
    %c0_i32_0 = arith.constant 0 : i32
    return %c0_i32, %arg0 : i32, i32
  }
  func.func @transform_3(%arg0: i32) -> (i32, i32) {
    %c0_i32 = arith.constant 0 : i32
    %c0_i32_0 = arith.constant 0 : i32
    return %c0_i32, %arg0 : i32, i32
  }
}

</mosaic_0001>

<llo_original>
// kernel: tpu_custom_call.1
$region0: #{tpu_custom_call.1}
  #allocation0 [shape = 'u32[]', space=smem, size = 0x4, offset = 0x4, fixed_abs, tag = 'smem constant byte address 0x4 - core index']
  #allocation1 [shape = 'u32[144,128]{1,0:T(1,128)}', space=vmem, size = 0x12000, scoped, tag = 'internal scratch']
  %s0 = inlined_call_operand.hbm [shape: f32[2,32], index: 0, kind: input, shape index: {}]
  %s1 = inlined_call_operand.hbm [shape: f32[32,256], index: 1, kind: input, shape index: {}]
  %s2 = inlined_call_operand.vmem [shape: f32[1,256], index: 2, kind: input, shape index: {}]
  %s3 = inlined_call_operand.hbm [shape: f32[2,256], index: 3, kind: output, shape index: {}]
  %s4 = sld [smem:[#allocation0]]
  $region30: #{tpu_custom_call.1} parent=0
    _
  %s6 = ssub.s32 1, %s4
  %s7 = scalar_select 0, %s6, %s4
  $region1: #{tpu_custom_call.1} parent=0
    #allocation2 [shape = 'u8[1024]{0}', space=vmem, size = 0x400, scoped, tag = 'input window, operand 0, single buffered']
    #allocation3 [shape = 's32[1]{0}', space=sflag, size = 0x4, scoped, tag = 'scoped memory for tpu_custom_call.1']
    #allocation4 [shape = 's32[1]{0}', space=sflag, size = 0x4, scoped, tag = 'scoped memory for tpu_custom_call.1']
    #allocation5 [shape = 'u8[32768]{0}', space=vmem, size = 0x8000, scoped, tag = 'input window, operand 1, single buffered']
    #allocation6 [shape = 's32[1]{0}', space=sflag, size = 0x4, scoped, tag = 'scoped memory for tpu_custom_call.1']
    #allocation7 [shape = 'u8[2048]{0}', space=vmem, size = 0x800, scoped, tag = 'output window, operand 0, single buffered']
    %8 = vsyncpa [#allocation3], 0
    %9 = vsyncpa [#allocation6], 0
    %10 = vsyncpa [#allocation4], 0
    // Predicated region
    $region2: #{tpu_custom_call.1} parent=1 // pred_check
      _
    $region3: #{tpu_custom_call.1} parent=1 // pred_check_branch
      %12 = sbr.rel (0) target = $region5
    $region4: #{tpu_custom_call.1} parent=1 // pred_region
      %s14 = ssub.s32 32, 32
      %15 = vsyncadd [#allocation3], %s14
      %s17 = sshll.u32 [#allocation2], 4
      %s18 = int_to_ptr.vmem [resolvable:$true] %s17
      %20 = dma.hbm_to_vmem [thread:$0]  %s0, 32, %s18, [#allocation3]
    $region5: #{tpu_custom_call.1} parent=1 // pred_fallthru
      _
    // Predicated region
    $region6: #{tpu_custom_call.1} parent=1 // pred_check
      _
    $region7: #{tpu_custom_call.1} parent=1 // pred_check_branch
      %22 = sbr.rel (0) target = $region9
    $region8: #{tpu_custom_call.1} parent=1 // pred_region
      %s24 = ssub.s32 1024, 1024
      %25 = vsyncadd [#allocation6], %s24
      %s26 = sshll.u32 [#allocation5], 4
      %s27 = int_to_ptr.vmem [resolvable:$true] %s26
      %32 = dma.hbm_to_vmem [thread:$0]  %s1, 1024, %s27, [#allocation6], 256, 256, 16
    $region9: #{tpu_custom_call.1} parent=1 // pred_fallthru
      _
    // Predicated region
    $region10: #{tpu_custom_call.1} parent=1 // pred_check
      _
    $region11: #{tpu_custom_call.1} parent=1 // pred_check_branch
      %34 = sbr.rel (0) target = $region13
    $region12: #{tpu_custom_call.1} parent=1 // pred_region
      _
    $region13: #{tpu_custom_call.1} parent=1 // pred_fallthru
      _
    // Predicated region
    $region14: #{tpu_custom_call.1} parent=1 // pred_check
      _
    $region15: #{tpu_custom_call.1} parent=1 // pred_check_branch
      %36 = sbr.rel (0) target = $region17
    $region16: #{tpu_custom_call.1} parent=1 // pred_region
      %37 = dma.done [#allocation3], 32
    $region17: #{tpu_custom_call.1} parent=1 // pred_fallthru
      _
    // Predicated region
    $region18: #{tpu_custom_call.1} parent=1 // pred_check
      _
    $region19: #{tpu_custom_call.1} parent=1 // pred_check_branch
      %39 = sbr.rel (0) target = $region21
    $region20: #{tpu_custom_call.1} parent=1 // pred_region
      %40 = dma.done [#allocation6], 1024
    $region21: #{tpu_custom_call.1} parent=1 // pred_fallthru
      _
    %v41 = vld [vmem:[#allocation2] sm:$0x3]
    %v42 = vld [vmem:[#allocation5] sm:$0xff]
    %v43 = vld [vmem:[#allocation5 + $0x8] sm:$0xff]
    %v44 = vld [vmem:[#allocation5 + $0x10] sm:$0xff]
    %v45 = vld [vmem:[#allocation5 + $0x18] sm:$0xff]
    %v46 = vld [vmem:[#allocation5 + $0x20] sm:$0xff]
    %v47 = vld [vmem:[#allocation5 + $0x28] sm:$0xff]
    %v48 = vld [vmem:[#allocation5 + $0x30] sm:$0xff]
    %v49 = vld [vmem:[#allocation5 + $0x38] sm:$0xff]
    %v50 = vld [vmem:[%s2] sm:$0x3]
    %v52 = vlaneseq
    %v53 = vshrl.u32 %v52, 7
    %v54 = vsub.s32 0, %v53
    %v55 = vrot.slane %v50, %v54
    %v56 = vlaneseq
    %v57 = vshrl.u32 %v56, 7
    %v58 = vsub.s32 1, %v57
    %v59 = vrot.slane %v50, %v58
    %vm62 = vcmask 261120
    %v64 = vsel %vm62, %v41, 0
    %66 = vmatprep.subr.mxu0 %v43
    %67 = vmatpush1.msra.mxu0 %v42
    %68 = vmatprep.subr.mxu0 %v45
    %69 = vmatpush1.msra.mxu0 %v44
    %70 = vmatprep.subr.mxu0 %v47
    %71 = vmatpush1.msra.mxu0 %v46
    %72 = vmatprep.subr.mxu0 %v49
    %73 = vmatpush1.msra.mxu0 %v48
    %74 = vmatprep.subr.mxu0 0.0
    %75 = vmatpush1.msra.mxu0 0.0
    %76 = vmatprep.subr.mxu0 0.0
    %77 = vmatpush1.msra.mxu0 0.0
    %78 = vmatprep.subr.mxu0 0.0
    %79 = vmatpush1.msra.mxu0 0.0
    %80 = vmatprep.subr.mxu0 0.0
    %81 = vmatpush1.msra.mxu0 0.0
    %82 = vmatprep.subr.mxu0 0.0
    %83 = vmatpush1.msra.mxu0 0.0
    %84 = vmatprep.subr.mxu0 0.0
    %85 = vmatpush1.msra.mxu0 0.0
    %86 = vmatprep.subr.mxu0 0.0
    %87 = vmatpush1.msra.mxu0 0.0
    %88 = vmatprep.subr.mxu0 0.0
    %89 = vmatpush1.msra.mxu0 0.0
    %90 = vmatprep.subr.mxu0 0.0
    %91 = vmatpush1.msra.mxu0 0.0
    %92 = vmatprep.subr.mxu0 0.0
    %93 = vmatpush1.msra.mxu0 0.0
    %94 = vmatprep.subr.mxu0 0.0
    %95 = vmatpush1.msra.mxu0 0.0
    %96 = vmatprep.subr.mxu0 0.0
    %97 = vmatpush1.msra.mxu0 0.0
    %98 = vmatprep.subr.mxu0 0.0
    %99 = vmatpush1.msra.mxu0 0.0
    %100 = vmatprep.subr.mxu0 0.0
    %101 = vmatpush1.msra.mxu0 0.0
    %102 = vmatprep.subr.mxu0 0.0
    %103 = vmatpush1.msra.mxu0 0.0
    %104 = vmatprep.subr.mxu0 0.0
    %105 = vmatpush1.msra.mxu0 0.0
    %106 = vmatprep.subr.mxu0 0.0
    %107 = vmatpush1.msra.mxu0 0.0
    %108 = vmatprep.subr.mxu0 0.0
    %109 = vmatpush1.msra.mxu0 0.0
    %110 = vmatprep.subr.mxu0 0.0
    %111 = vmatpush1.msra.mxu0 0.0
    %112 = vmatprep.subr.mxu0 0.0
    %113 = vmatpush1.msra.mxu0 0.0
    %114 = vmatprep.subr.mxu0 0.0
    %115 = vmatpush1.msra.mxu0 0.0
    %116 = vmatprep.subr.mxu0 0.0
    %117 = vmatpush1.msra.mxu0 0.0
    %118 = vmatprep.subr.mxu0 0.0
    %119 = vmatpush1.msra.mxu0 0.0
    %120 = vmatprep.subr.mxu0 0.0
    %121 = vmatpush1.msra.mxu0 0.0
    %122 = vmatprep.subr.mxu0 0.0
    %123 = vmatpush1.msra.mxu0 0.0
    %124 = vmatprep.subr.mxu0 0.0
    %125 = vmatpush1.msra.mxu0 0.0
    %126 = vmatprep.subr.mxu0 0.0
    %127 = vmatpush1.msra.mxu0 0.0
    %128 = vmatprep.subr.mxu0 0.0
    %129 = vmatpush1.msra.mxu0 0.0
    %130 = vmatprep.mubr.f32.mxu0 0.0
    %131 = vmatmul.mubr.f32.gmra.mrb[0].mxu0 %v64
    %v132 = vpop.f32.mrb[0].mxu0
    %v133 = vadd.f32 %v55, %v132
    %v134 = vpop.f32.mrb[0].mxu0
    %v135 = vadd.f32 %v59, %v134
    %136 = vdwg.mxu0
    %vm137 = vcmp.gt.f32.partialorder %v133, 0.0
    %vm138 = vcmp.gt.f32.partialorder %v135, 0.0
    %v139 = vmul.f32 %v133, 0.01
    %v140 = vmul.f32 %v135, 0.01
    %v141 = vsel %vm137, %v133, %v139
    %v142 = vsel %vm138, %v135, %v140
    %v145 = vcombine.low %v141, %v142
    %v147 = vunpack.c.l.s4 1983009808
    %v148 = vunpack.c.0.s8 %v147
    %v149 = vlaneseq
    %v150 = vshrl.u32 %v149, 7
    %v151 = vsub.s32 %v148, %v150
    %v152 = vrot.slane %v145, %v151
    %154 = vst [vmem:[#allocation7] sm:$0xf] %v152
    // Predicated region
    $region22: #{tpu_custom_call.1} parent=1 // pred_check
      _
    $region23: #{tpu_custom_call.1} parent=1 // pred_check_branch
      %156 = sbr.rel (0) target = $region25
    $region24: #{tpu_custom_call.1} parent=1 // pred_region
      %s158 = ssub.s32 64, 64
      %159 = vsyncadd [#allocation4], %s158
      %s161 = sshll.u32 [#allocation7], 4
      %s162 = int_to_ptr.vmem [resolvable:$true] %s161
      %164 = dma.vmem_to_hbm [thread:$0]  %s162, 64, %s3, [#allocation4]
    $region25: #{tpu_custom_call.1} parent=1 // pred_fallthru
      _
    // Predicated region
    $region26: #{tpu_custom_call.1} parent=1 // pred_check
      _
    $region27: #{tpu_custom_call.1} parent=1 // pred_check_branch
      %166 = sbr.rel (0) target = $region29
    $region28: #{tpu_custom_call.1} parent=1 // pred_region
      %167 = dma.done [#allocation4], 64
    $region29: #{tpu_custom_call.1} parent=1 // pred_fallthru
      _
    %168 = vsyncpa [#allocation3], 1
    %169 = vsyncpa [#allocation6], 1
    %170 = vsyncpa [#allocation4], 1

</llo_original>
